<compile_context>
chip_gen: v7x
topology: tpu7x:2x2x1
jax: 0.10.0
libtpu: 0.0.40
codegen_flags: <defaults>
</compile_context>

<pallas_src>
import functools

import jax
import jax.numpy as jnp
from jax.experimental import pallas as pl
from jax.experimental.pallas import tpu as pltpu

BN_EPS = 1e-5


def _round_up(x, m):
    return (x + m - 1) // m * m


def _vmem_limit_bytes():
    """Generation-aware scoped-VMEM limit: ~48 MiB on 64 MiB parts (v7x),
    ~96 MiB on 128 MiB parts (v5e/v6e)."""
    try:
        cap = int(pltpu.get_tpu_info().vmem_capacity_bytes)
    except Exception:
        cap = 64 << 20   # conservative (v7x-sized) fallback
    return max(32 << 20, min((cap * 3) // 4, 96 << 20))


def fold_conv_bn(w, b, gamma, beta, mean, var, eps=BN_EPS):
    """Fold 1x1 conv (+bias) followed by eval-mode BatchNorm into (weight, bias).

    y = gamma*(w@x + b - mean)/sqrt(var+eps) + beta  ==  (s*w)@x + (s*(b-mean)+beta)
    """
    s = gamma / jnp.sqrt(var + eps)
    w_f = (w * s[:, None]).astype(jnp.float32)          # (Cout, Cin)
    t = (s * (b - mean) + beta).reshape(-1, 1).astype(jnp.float32)   # (Cout, 1)
    return w_f, t


# --------------------------------------------------------------------------- #
# Kernels
# --------------------------------------------------------------------------- #
def _mf_tiled_kernel(x_ref, res_ref, t2_ref, w1_ref, t1_ref, w2_ref, out_ref,
                     *, approx):
    # Grid step = (batch element, spatial tile).
    # x/res/out : (1, C, THW)  activations, caller dtype (f32 or bf16)
    # t2_ref    : (1, C, 1)    f32: conv2 bias + BN + per-batch global logits
    # w1 / w2   : (Ci, C)/(C, Ci)  BN-scale-folded 1x1 conv weights (act dtype)
    # t1        : (Ci, 1)      f32
    x = x_ref[0]
    res = res_ref[0]

    # local branch: conv1x1 -> (folded BN bias) -> ReLU -> conv1x1 -> (+ bias+xg)
    h = jnp.dot(w1_ref[...], x, preferred_element_type=jnp.float32)     # (Ci, THW)
    h = jnp.maximum(h + t1_ref[...], 0.0)
    z = jnp.dot(w2_ref[...], h.astype(x.dtype),
                preferred_element_type=jnp.float32)                     # (C, THW)
    z = z + t2_ref[0]

    # sigmoid via EUP exp + EUP reciprocal (approx only in the bf16 path)
    wei = pl.reciprocal(1.0 + jnp.exp(-z), approx=approx)               # f32

    # blend: x*wei + res*(1-wei) == res + wei*(x-res); bf16 blend for bf16 I/O
    wei = wei if x.dtype == jnp.float32 else wei.astype(x.dtype)
    out_ref[0] = (res + wei * (x - res)).astype(out_ref.dtype)


def _mf_fused_kernel(x_ref, res_ref, w1_ref, t1_ref, w2_ref, t2_ref,
                     wg1_ref, tg1_ref, wg2_ref, tg2_ref, out_ref,
                     *, inv_hw, approx):
    # Grid step = one batch element; the full (C, HW) slab is resident in VMEM.
    x = x_ref[0]
    res = res_ref[0]

    # global branch: GAP (cross-lane reduce, XLU) -> conv -> ReLU -> conv
    gap = jnp.sum(x.astype(jnp.float32), axis=-1, keepdims=True) * inv_hw     # (C, 1)
    g = jnp.dot(wg1_ref[...], gap, preferred_element_type=jnp.float32) + tg1_ref[...]
    g = jnp.maximum(g, 0.0)                                                   # (Ci, 1)
    xg = jnp.dot(wg2_ref[...], g, preferred_element_type=jnp.float32) + tg2_ref[...]

    # local branch
    h = jnp.dot(w1_ref[...], x, preferred_element_type=jnp.float32)           # (Ci, HW)
    h = jnp.maximum(h + t1_ref[...], 0.0)
    z = jnp.dot(w2_ref[...], h.astype(x.dtype),
                preferred_element_type=jnp.float32)                           # (C, HW)
    z = z + (t2_ref[...] + xg)

    wei = pl.reciprocal(1.0 + jnp.exp(-z), approx=approx)
    wei = wei if x.dtype == jnp.float32 else wei.astype(x.dtype)
    out_ref[0] = (res + wei * (x - res)).astype(out_ref.dtype)


# --------------------------------------------------------------------------- #
# Wrapper
# --------------------------------------------------------------------------- #
def _choose_tile_hw(hw, c, ci, io_bytes, budget, min_tiles):
    """Largest multiple-of-128 spatial tile whose VMEM footprint fits `budget`.

    Per-lane bytes = pipeline buffers (3 streams x 2 bufs x C x io_bytes)
                   + f32 temporaries (h + ~4 full-C slabs: z, wei, casts, slack).
    """
    per_lane = 6 * c * io_bytes + (ci + 4 * c) * 4
    tile = (budget // per_lane) // 128 * 128
    tile = min(tile, 4096, _round_up(hw, 128))
    if min_tiles > 1:
        tile = min(tile, max(128, _round_up(pl.cdiv(hw, min_tiles), 128)))
    tile = max(tile, 128)
    if tile >= hw:
        tile = hw        # block == full extent (legal for any hw)
    return tile


def mf_attention(x_nchw, residual_nchw, params, *, mode="auto", tile_hw=None,
                 out_dtype=None):
    """MFAttention forward.  params = (w_l1, t_l1, w_l2, t_l2, w_g1, t_g1,
    w_g2, t_g2), with conv bias + eval BN folded (see fold_conv_bn)."""
    assert x_nchw.dtype == residual_nchw.dtype, "x / residual dtype mismatch"
    B, C, H, W = x_nchw.shape
    HW = H * W
    io_dtype = x_nchw.dtype
    out_dtype = out_dtype or io_dtype
    io_bytes = jnp.dtype(io_dtype).itemsize

    w_l1, t_l1, w_l2, t_l2, w_g1, t_g1, w_g2, t_g2 = params
    Ci = w_l1.shape[0]

    # NCHW -> (B, C, HW): pure reshape, no transpose; keep the caller's dtype
    # (no materialized wrapper-side cast pass over the activations).
    x = x_nchw.reshape(B, C, HW)
    res = residual_nchw.reshape(B, C, HW)

    # Big-matmul weights in the activation dtype (tiny arrays); biases stay f32.
    w1 = w_l1.astype(io_dtype)
    w2 = w_l2.astype(io_dtype)

    approx = io_dtype == jnp.bfloat16
    vmem_limit = _vmem_limit_bytes()
    budget = vmem_limit - (4 << 20)

    # ----- fused-GAP fast path: one batch slab resident, GAP + global branch
    # computed in-kernel (saves one full HBM read of x). -----
    fused_bytes = 6 * C * HW * io_bytes + (Ci + 4 * C) * HW * 4
    use_fused = (mode == "fused") or (
        mode == "auto" and fused_bytes <= budget and (B >= 2 or HW <= 128))

    if use_fused:
        act = pl.BlockSpec((1, C, HW), lambda b: (b, 0, 0))
        full = lambda a: pl.BlockSpec(a.shape, lambda b: (0, 0))
        out = pl.pallas_call(
            functools.partial(_mf_fused_kernel, inv_hw=1.0 / HW, approx=approx),
            out_shape=jax.ShapeDtypeStruct((B, C, HW), out_dtype),
            grid_spec=pltpu.PrefetchScalarGridSpec(
                num_scalar_prefetch=0,
                grid=(B,),
                in_specs=[act, act,
                          full(w1), full(t_l1), full(w2), full(t_l2),
                          full(w_g1), full(t_g1), full(w_g2), full(t_g2)],
                out_specs=act,
            ),
            compiler_params=pltpu.CompilerParams(
                dimension_semantics=("parallel",),
                vmem_limit_bytes=vmem_limit),
        )(x, res, w1, t_l1, w2, t_l2, w_g1, t_g1, w_g2, t_g2)
        return out.reshape(B, C, H, W)

    # ----- tiled path: precompute the global branch (GAP over the FULL
    # spatial extent, independent of tiling) and fold it into the conv2 bias. -----
    gap = jnp.mean(x.astype(jnp.float32), axis=-1)                    # (B, C)
    g = jnp.maximum(gap @ w_g1.T + t_g1[:, 0], 0.0)                   # (B, Ci)
    xg = g @ w_g2.T + t_g2[:, 0]                                      # (B, C)
    t2b = (xg + t_l2[:, 0])[..., None].astype(jnp.float32)            # (B, C, 1)

    if tile_hw is None:
        min_tiles = 2 if B == 1 else 1      # keep both v7x TCs busy at B == 1
        tile_hw = _choose_tile_hw(HW, C, Ci, io_bytes, budget, min_tiles)
    else:
        tile_hw = HW if tile_hw >= HW else min(_round_up(tile_hw, 128), HW)

    n_t = pl.cdiv(HW, tile_hw)              # cdiv: partial edge blocks are OK

    act = pl.BlockSpec((1, C, tile_hw), lambda b, t: (b, 0, t))
    full = lambda a: pl.BlockSpec(a.shape, lambda b, t: (0, 0))

    out = pl.pallas_call(
        functools.partial(_mf_tiled_kernel, approx=approx),
        out_shape=jax.ShapeDtypeStruct((B, C, HW), out_dtype),
        grid_spec=pltpu.PrefetchScalarGridSpec(
            num_scalar_prefetch=0,
            grid=(B, n_t),
            in_specs=[act, act,
                      pl.BlockSpec((1, C, 1), lambda b, t: (b, 0, 0)),   # t2b
                      full(w1), full(t_l1), full(w2)],
            out_specs=act,
        ),
        compiler_params=pltpu.CompilerParams(
            dimension_semantics=("parallel", "parallel"),
            vmem_limit_bytes=vmem_limit),
    )(x, res, t2b, w1, t_l1, w2)
    return out.reshape(B, C, H, W)


# --------------------------------------------------------------------------- #
# Synthetic params + pure-JAX reference
# --------------------------------------------------------------------------- #
def make_params(key, channels, r):
    """Deterministic synthetic parameters matching MFAttention.__init__ shapes,
    with conv bias + eval-mode BatchNorm folded into (weight, bias) pairs."""
    Ci = channels // r
    ks = jax.random.split(key, 12)

    def conv_w(k, cout, cin):
        w = jax.random.normal(k, (cout, cin, 1, 1), jnp.float32) * 0.1
        return w[:, :, 0, 0]

    def bn(k, c):
        k1, k2, k3, k4 = jax.random.split(k, 4)
        gamma = 1.0 + 0.1 * jax.random.normal(k1, (c,), jnp.float32)
        beta = 0.1 * jax.random.normal(k2, (c,), jnp.float32)
        mean = 0.1 * jax.random.normal(k3, (c,), jnp.float32)
        var = jnp.abs(jax.random.normal(k4, (c,), jnp.float32)) + 0.5
        return gamma, beta, mean, var

    w_l1, t_l1 = fold_conv_bn(conv_w(ks[0], Ci, channels),
                              0.05 * jax.random.normal(ks[1], (Ci,), jnp.float32),
                              *bn(ks[2], Ci))
    w_l2, t_l2 = fold_conv_bn(conv_w(ks[3], channels, Ci),
                              0.05 * jax.random.normal(ks[4], (channels,), jnp.float32),
                              *bn(ks[5], channels))
    w_g1, t_g1 = fold_conv_bn(conv_w(ks[6], Ci, channels),
                              0.05 * jax.random.normal(ks[7], (Ci,), jnp.float32),
                              *bn(ks[8], Ci))
    w_g2, t_g2 = fold_conv_bn(conv_w(ks[9], channels, Ci),
                              0.05 * jax.random.normal(ks[10], (channels,), jnp.float32),
                              *bn(ks[11], channels))
    return (w_l1, t_l1, w_l2, t_l2, w_g1, t_g1, w_g2, t_g2)


def mf_attention_reference(x_nchw, res_nchw, params):
    """Pure-JAX f32 reference (same eval-mode BN folding)."""
    w1, t1, w2, t2, wg1, tg1, wg2, tg2 = params
    B, C, H, W = x_nchw.shape
    x = x_nchw.reshape(B, C, H * W).astype(jnp.float32)
    res = res_nchw.reshape(B, C, H * W).astype(jnp.float32)

    h = jnp.maximum(jnp.einsum('ic,bcs->bis', w1, x) + t1, 0.0)
    xl = jnp.einsum('ci,bis->bcs', w2, h) + t2

    gap = jnp.mean(x, axis=-1)                                        # (B, C)
    g = jnp.maximum(gap @ wg1.T + tg1[:, 0], 0.0)
    xg = (g @ wg2.T + tg2[:, 0])[..., None]                           # (B, C, 1)

    wei = jax.nn.sigmoid(xl + xg)
    out = x * wei + res * (1.0 - wei)
    return out.reshape(B, C, H, W)


if __name__ == "__main__":
    channels, r = 8, 2
    params = make_params(jax.random.PRNGKey(42), channels, r)

    key = jax.random.PRNGKey(0)
    kx, kr, kx1, kr1 = jax.random.split(key, 4)

    # ---- A: B=2, 16x16, f32, auto -> fused in-kernel-GAP path ----
    x = jax.random.normal(kx, (2, channels, 16, 16), jnp.float32)
    res = jax.random.normal(kr, (2, channels, 16, 16), jnp.float32)
    ref = mf_attention_reference(x, res, params)

    out_fused = jax.block_until_ready(mf_attention(x, res, params, mode="auto"))
    assert out_fused.shape == x.shape
    assert jnp.max(jnp.abs(out_fused - ref)) < 1e-4, "fused f32 mismatch"

    # ---- B: same inputs, forced tiled path (2 full 128-lane tiles) ----
    out_tiled = jax.block_until_ready(
        mf_attention(x, res, params, mode="tiled", tile_hw=128))
    assert jnp.max(jnp.abs(out_tiled - ref)) < 1e-4, "tiled f32 mismatch"

    # ---- C: B=1, 14x14 (HW=196, not a multiple of 128) -> cdiv tiling with a
    # partial edge block and >=2 tiles for megacore ----
    x1 = jax.random.normal(kx1, (1, channels, 14, 14), jnp.float32)
    r1 = jax.random.normal(kr1, (1, channels, 14, 14), jnp.float32)
    ref1 = mf_attention_reference(x1, r1, params)
    out1 = jax.block_until_ready(mf_attention(x1, r1, params, mode="auto"))
    assert jnp.max(jnp.abs(out1 - ref1)) < 1e-4, "partial-tile f32 mismatch"

    # ---- D: bf16 activations supplied by "upstream" (no wrapper cast pass),
    # bf16 in-kernel blend, f32 accumulation ----
    xb = x.astype(jnp.bfloat16)
    rb = res.astype(jnp.bfloat16)
    outb = jax.block_until_ready(mf_attention(xb, rb, params, mode="auto"))
    assert outb.dtype == jnp.bfloat16
    diff = jnp.abs(outb.astype(jnp.float32) - ref)
    assert jnp.max(diff) < 2e-1 and jnp.mean(diff) < 2e-2, "bf16 mismatch"

    print("KERNEL_OK")
</pallas_src>

<mosaic_0001>
module attributes {stable_mosaic.version = 11 : i64} {
  func.func @_mf_fused_kernel(%arg0: i32, %arg1: memref<1x8x256xf32, #tpu.memory_space<vmem>>, %arg2: memref<1x8x256xf32, #tpu.memory_space<vmem>>, %arg3: memref<4x8xf32, #tpu.memory_space<vmem>>, %arg4: memref<4x1xf32, #tpu.memory_space<vmem>>, %arg5: memref<8x4xf32, #tpu.memory_space<vmem>>, %arg6: memref<8x1xf32, #tpu.memory_space<vmem>>, %arg7: memref<4x8xf32, #tpu.memory_space<vmem>>, %arg8: memref<4x1xf32, #tpu.memory_space<vmem>>, %arg9: memref<8x4xf32, #tpu.memory_space<vmem>>, %arg10: memref<8x1xf32, #tpu.memory_space<vmem>>, %arg11: memref<1x8x256xf32, #tpu.memory_space<vmem>>) attributes {dimension_semantics = [#tpu.dimension_semantics<parallel>], iteration_bounds = array<i64: 2>, scalar_prefetch = 0 : i64, scratch_operands = 0 : i64, tpu.core_type = #tpu.core_type<tc>, window_params = [{transform_indices = @transform_0, window_bounds = array<i64: 1, 8, 256>}, {transform_indices = @transform_1, window_bounds = array<i64: 1, 8, 256>}, {pipeline_mode = #tpu.pipeline_mode<synchronous>, transform_indices = @transform_2, window_bounds = array<i64: 4, 8>}, {pipeline_mode = #tpu.pipeline_mode<synchronous>, transform_indices = @transform_3, window_bounds = array<i64: 4, 1>}, {pipeline_mode = #tpu.pipeline_mode<synchronous>, transform_indices = @transform_4, window_bounds = array<i64: 8, 4>}, {pipeline_mode = #tpu.pipeline_mode<synchronous>, transform_indices = @transform_5, window_bounds = array<i64: 8, 1>}, {pipeline_mode = #tpu.pipeline_mode<synchronous>, transform_indices = @transform_6, window_bounds = array<i64: 4, 8>}, {pipeline_mode = #tpu.pipeline_mode<synchronous>, transform_indices = @transform_7, window_bounds = array<i64: 4, 1>}, {pipeline_mode = #tpu.pipeline_mode<synchronous>, transform_indices = @transform_8, window_bounds = array<i64: 8, 4>}, {pipeline_mode = #tpu.pipeline_mode<synchronous>, transform_indices = @transform_9, window_bounds = array<i64: 8, 1>}, {transform_indices = @transform_10, window_bounds = array<i64: 1, 8, 256>}]} {
    %c0 = arith.constant 0 : index
    %c0_0 = arith.constant 0 : index
    %c0_1 = arith.constant 0 : index
    %0 = vector.load %arg1[%c0, %c0_0, %c0_1] : memref<1x8x256xf32, #tpu.memory_space<vmem>>, vector<1x8x256xf32>
    %1 = vector.shape_cast %0 : vector<1x8x256xf32> to vector<8x256xf32>
    %c0_2 = arith.constant 0 : index
    %c0_3 = arith.constant 0 : index
    %c0_4 = arith.constant 0 : index
    %2 = vector.load %arg2[%c0_2, %c0_3, %c0_4] : memref<1x8x256xf32, #tpu.memory_space<vmem>>, vector<1x8x256xf32>
    %3 = vector.shape_cast %2 : vector<1x8x256xf32> to vector<8x256xf32>
    %cst = arith.constant dense<0.000000e+00> : vector<8xf32>
    %4 = vector.multi_reduction <add>, %1, %cst [1] : vector<8x256xf32> to vector<8xf32>
    %5 = vector.shape_cast %4 : vector<8xf32> to vector<8x1xf32>
    %cst_5 = arith.constant 3.906250e-03 : f32
    %6 = vector.broadcast %cst_5 : f32 to vector<8x1xf32>
    %7 = arith.mulf %5, %6 : vector<8x1xf32>
    %c0_6 = arith.constant 0 : index
    %c0_7 = arith.constant 0 : index
    %8 = vector.load %arg7[%c0_6, %c0_7] : memref<4x8xf32, #tpu.memory_space<vmem>>, vector<4x8xf32>
    %cst_8 = arith.constant dense<0.000000e+00> : vector<4x1xf32>
    %9 = tpu.matmul %8, %7, %cst_8 {dimension_numbers = #tpu.dot_dimension_numbers<[1], [0], [0], [1], [0, 0, 1, 1], [], []>} : vector<4x8xf32>, vector<8x1xf32>, vector<4x1xf32> -> vector<4x1xf32>
    %c0_9 = arith.constant 0 : index
    %c0_10 = arith.constant 0 : index
    %10 = vector.load %arg8[%c0_9, %c0_10] : memref<4x1xf32, #tpu.memory_space<vmem>>, vector<4x1xf32>
    %11 = arith.addf %9, %10 : vector<4x1xf32>
    %cst_11 = arith.constant 0.000000e+00 : f32
    %12 = vector.broadcast %cst_11 : f32 to vector<4x1xf32>
    %13 = arith.maximumf %11, %12 : vector<4x1xf32>
    %c0_12 = arith.constant 0 : index
    %c0_13 = arith.constant 0 : index
    %14 = vector.load %arg9[%c0_12, %c0_13] : memref<8x4xf32, #tpu.memory_space<vmem>>, vector<8x4xf32>
    %cst_14 = arith.constant dense<0.000000e+00> : vector<8x1xf32>
    %15 = tpu.matmul %14, %13, %cst_14 {dimension_numbers = #tpu.dot_dimension_numbers<[1], [0], [0], [1], [0, 0, 1, 1], [], []>} : vector<8x4xf32>, vector<4x1xf32>, vector<8x1xf32> -> vector<8x1xf32>
    %c0_15 = arith.constant 0 : index
    %c0_16 = arith.constant 0 : index
    %16 = vector.load %arg10[%c0_15, %c0_16] : memref<8x1xf32, #tpu.memory_space<vmem>>, vector<8x1xf32>
    %17 = arith.addf %15, %16 : vector<8x1xf32>
    %c0_17 = arith.constant 0 : index
    %c0_18 = arith.constant 0 : index
    %18 = vector.load %arg3[%c0_17, %c0_18] : memref<4x8xf32, #tpu.memory_space<vmem>>, vector<4x8xf32>
    %cst_19 = arith.constant dense<0.000000e+00> : vector<4x256xf32>
    %19 = tpu.matmul %18, %1, %cst_19 {dimension_numbers = #tpu.dot_dimension_numbers<[1], [0], [0], [1], [0, 0, 1, 1], [], []>} : vector<4x8xf32>, vector<8x256xf32>, vector<4x256xf32> -> vector<4x256xf32>
    %c0_20 = arith.constant 0 : index
    %c0_21 = arith.constant 0 : index
    %20 = vector.load %arg4[%c0_20, %c0_21] : memref<4x1xf32, #tpu.memory_space<vmem>>, vector<4x1xf32>
    %21 = vector.broadcast %20 : vector<4x1xf32> to vector<4x256xf32>
    %22 = arith.addf %19, %21 : vector<4x256xf32>
    %cst_22 = arith.constant 0.000000e+00 : f32
    %23 = vector.broadcast %cst_22 : f32 to vector<4x256xf32>
    %24 = arith.maximumf %22, %23 : vector<4x256xf32>
    %c0_23 = arith.constant 0 : index
    %c0_24 = arith.constant 0 : index
    %25 = vector.load %arg5[%c0_23, %c0_24] : memref<8x4xf32, #tpu.memory_space<vmem>>, vector<8x4xf32>
    %cst_25 = arith.constant dense<0.000000e+00> : vector<8x256xf32>
    %26 = tpu.matmul %25, %24, %cst_25 {dimension_numbers = #tpu.dot_dimension_numbers<[1], [0], [0], [1], [0, 0, 1, 1], [], []>} : vector<8x4xf32>, vector<4x256xf32>, vector<8x256xf32> -> vector<8x256xf32>
    %c0_26 = arith.constant 0 : index
    %c0_27 = arith.constant 0 : index
    %27 = vector.load %arg6[%c0_26, %c0_27] : memref<8x1xf32, #tpu.memory_space<vmem>>, vector<8x1xf32>
    %28 = arith.addf %27, %17 : vector<8x1xf32>
    %29 = vector.broadcast %28 : vector<8x1xf32> to vector<8x256xf32>
    %30 = arith.addf %26, %29 : vector<8x256xf32>
    %cst_28 = arith.constant 0.000000e+00 : f32
    %31 = vector.broadcast %cst_28 : f32 to vector<8x256xf32>
    %32 = arith.subf %31, %30 : vector<8x256xf32>
    %33 = math.exp %32 : vector<8x256xf32>
    %cst_29 = arith.constant 1.000000e+00 : f32
    %34 = vector.broadcast %cst_29 : f32 to vector<8x256xf32>
    %35 = arith.addf %34, %33 : vector<8x256xf32>
    %36 = tpu.reciprocal %35 : vector<8x256xf32> -> vector<8x256xf32>
    %37 = arith.subf %1, %3 : vector<8x256xf32>
    %38 = arith.mulf %36, %37 : vector<8x256xf32>
    %39 = arith.addf %3, %38 : vector<8x256xf32>
    %c0_30 = arith.constant 0 : index
    %c0_31 = arith.constant 0 : index
    %c0_32 = arith.constant 0 : index
    %40 = vector.load %arg11[%c0_30, %c0_31, %c0_32] : memref<1x8x256xf32, #tpu.memory_space<vmem>>, vector<1x8x256xf32>
    %41 = vector.shape_cast %40 : vector<1x8x256xf32> to vector<8x256xf32>
    %42 = vector.shape_cast %39 : vector<8x256xf32> to vector<1x8x256xf32>
    tpu.vector_store %arg11[%c0_30, %c0_31, %c0_32], %42 {strides = array<i32>} : memref<1x8x256xf32, #tpu.memory_space<vmem>>, vector<1x8x256xf32>,
    return
  }
  func.func @transform_0(%arg0: i32) -> (i32, i32, i32) {
    %c0_i32 = arith.constant 0 : i32
    %c0_i32_0 = arith.constant 0 : i32
    %c0_i32_1 = arith.constant 0 : i32
    return %arg0, %c0_i32, %c0_i32_0 : i32, i32, i32
  }
  func.func @transform_1(%arg0: i32) -> (i32, i32, i32) {
    %c0_i32 = arith.constant 0 : i32
    %c0_i32_0 = arith.constant 0 : i32
    %c0_i32_1 = arith.constant 0 : i32
    return %arg0, %c0_i32, %c0_i32_0 : i32, i32, i32
  }
  func.func @transform_2(%arg0: i32) -> (i32, i32) {
    %c0_i32 = arith.constant 0 : i32
    %c0_i32_0 = arith.constant 0 : i32
    %c0_i32_1 = arith.constant 0 : i32
    return %c0_i32, %c0_i32_0 : i32, i32
  }
  func.func @transform_3(%arg0: i32) -> (i32, i32) {
    %c0_i32 = arith.constant 0 : i32
    %c0_i32_0 = arith.constant 0 : i32
    %c0_i32_1 = arith.constant 0 : i32
    return %c0_i32, %c0_i32_0 : i32, i32
  }
  func.func @transform_4(%arg0: i32) -> (i32, i32) {
    %c0_i32 = arith.constant 0 : i32
    %c0_i32_0 = arith.constant 0 : i32
    %c0_i32_1 = arith.constant 0 : i32
    return %c0_i32, %c0_i32_0 : i32, i32
  }
  func.func @transform_5(%arg0: i32) -> (i32, i32) {
    %c0_i32 = arith.constant 0 : i32
    %c0_i32_0 = arith.constant 0 : i32
    %c0_i32_1 = arith.constant 0 : i32
    return %c0_i32, %c0_i32_0 : i32, i32
  }
  func.func @transform_6(%arg0: i32) -> (i32, i32) {
    %c0_i32 = arith.constant 0 : i32
    %c0_i32_0 = arith.constant 0 : i32
    %c0_i32_1 = arith.constant 0 : i32
    return %c0_i32, %c0_i32_0 : i32, i32
  }
  func.func @transform_7(%arg0: i32) -> (i32, i32) {
    %c0_i32 = arith.constant 0 : i32
    %c0_i32_0 = arith.constant 0 : i32
    %c0_i32_1 = arith.constant 0 : i32
    return %c0_i32, %c0_i32_0 : i32, i32
  }
  func.func @transform_8(%arg0: i32) -> (i32, i32) {
    %c0_i32 = arith.constant 0 : i32
    %c0_i32_0 = arith.constant 0 : i32
    %c0_i32_1 = arith.constant 0 : i32
    return %c0_i32, %c0_i32_0 : i32, i32
  }
  func.func @transform_9(%arg0: i32) -> (i32, i32) {
    %c0_i32 = arith.constant 0 : i32
    %c0_i32_0 = arith.constant 0 : i32
    %c0_i32_1 = arith.constant 0 : i32
    return %c0_i32, %c0_i32_0 : i32, i32
  }
  func.func @transform_10(%arg0: i32) -> (i32, i32, i32) {
    %c0_i32 = arith.constant 0 : i32
    %c0_i32_0 = arith.constant 0 : i32
    %c0_i32_1 = arith.constant 0 : i32
    return %arg0, %c0_i32, %c0_i32_0 : i32, i32, i32
  }
}

</mosaic_0001>

<llo_original>
// kernel: tpu_custom_call.1
$region0: #{tpu_custom_call.1}
  #allocation0 [shape = 'u32[]', space=smem, size = 0x4, offset = 0x4, fixed_abs, tag = 'smem constant byte address 0x4 - core index']
  #allocation1 [shape = 'u32[144,128]{1,0:T(1,128)}', space=vmem, size = 0x12000, scoped, tag = 'internal scratch']
  %s0 = inlined_call_operand.vmem [shape: f32[2,8,256], index: 0, kind: input, shape index: {}]
  %s1 = inlined_call_operand.hbm [shape: f32[2,8,256], index: 1, kind: input, shape index: {}]
  %s2 = inlined_call_operand.vmem [shape: f32[4,8], index: 2, kind: input, shape index: {}]
  %s3 = inlined_call_operand.vmem [shape: f32[4,1], index: 3, kind: input, shape index: {}]
  %s4 = inlined_call_operand.vmem [shape: f32[8,4], index: 4, kind: input, shape index: {}]
  %s5 = inlined_call_operand.vmem [shape: f32[8,1], index: 5, kind: input, shape index: {}]
  %s6 = inlined_call_operand.vmem [shape: f32[4,8], index: 6, kind: input, shape index: {}]
  %s7 = inlined_call_operand.vmem [shape: f32[4,1], index: 7, kind: input, shape index: {}]
  %s8 = inlined_call_operand.vmem [shape: f32[8,4], index: 8, kind: input, shape index: {}]
  %s9 = inlined_call_operand.vmem [shape: f32[8,1], index: 9, kind: input, shape index: {}]
  %s10 = inlined_call_operand.hbm [shape: f32[2,8,256], index: 10, kind: output, shape index: {}]
  %s11 = sld [smem:[#allocation0]]
  $region77: #{tpu_custom_call.1} parent=0
    _
  %s13 = ssub.s32 1, %s11
  %s14 = scalar_select 0, %s13, %s11
  $region1: #{tpu_custom_call.1} parent=0
    #allocation2 [shape = 'u8[16384]{0}', space=vmem, size = 0x4000, scoped, tag = 'input window, operand 1']
    #allocation3 [shape = 's32[2]{0}', space=sflag, size = 0x8, scoped, tag = 'scoped memory for tpu_custom_call.1']
    #allocation4 [shape = 's32[2]{0}', space=sflag, size = 0x8, scoped, tag = 'scoped memory for tpu_custom_call.1']
    #allocation5 [shape = 'u8[16384]{0}', space=vmem, size = 0x4000, scoped, tag = 'output window, operand 0']
    %15 = vsyncpa [#allocation3], 0
    %s16 = scalar_lea.sflag [#allocation3], 1
    %17 = vsyncpa %s16, 0
    %18 = vsyncpa [#allocation4], 0
    %s19 = scalar_lea.sflag [#allocation4], 1
    %20 = vsyncpa %s19, 0
    loop: start=0, step=1, limit=4
    $region2: #{tpu_custom_call.1} parent=1 // loop_pre_header
      _
    $region3: #{tpu_custom_call.1} parent=1 // loop_header
      %s22 = sphi 0, %s26
      %p23 = scmp.ge.s32.totalorder %s22, 4
      %s32 = sphi 0, %s34
      %s35 = sphi 0, %s32
      %s36 = sphi 0, %s35
      %s52 = sphi 0, %s36
      %s58 = sphi 0, %s60
      %s61 = sphi 0, %s58
      %s62 = sphi 0, %s61
      %s78 = sphi 0, %s62
      %s82 = sphi 0, %s82
      %s84 = sphi 0, %s82
      %s85 = sphi 0, %s84
      %s99 = sphi 0, %s85
      %s103 = sphi 0, %s103
      %s105 = sphi 0, %s103
      %s106 = sphi 0, %s105
      %s120 = sphi 0, %s106
      %s124 = sphi 0, %s124
      %s126 = sphi 0, %s124
      %s127 = sphi 0, %s126
      %s141 = sphi 0, %s127
      %s145 = sphi 0, %s145
      %s147 = sphi 0, %s145
      %s148 = sphi 0, %s147
      %s162 = sphi 0, %s148
      %s166 = sphi 0, %s166
      %s168 = sphi 0, %s166
      %s169 = sphi 0, %s168
      %s183 = sphi 0, %s169
      %s187 = sphi 0, %s187
      %s189 = sphi 0, %s187
      %s190 = sphi 0, %s189
      %s204 = sphi 0, %s190
      %s208 = sphi 0, %s208
      %s210 = sphi 0, %s208
      %s211 = sphi 0, %s210
      %s225 = sphi 0, %s211
      %s229 = sphi 0, %s229
      %s231 = sphi 0, %s229
      %s232 = sphi 0, %s231
      %s246 = sphi 0, %s232
      %s252 = sphi 0, %s254
      %s255 = sphi 0, %s252
      %s256 = sphi 0, %s255
      %s272 = sphi 0, %s256
    $region4: #{tpu_custom_call.1} parent=1 // loop_header_branch
      %25 = sbr.rel (%p23) target = $region8
    $region5: #{tpu_custom_call.1} parent=1 // loop_body
      %s27 = ssub.s32 %s22, 1
      %s28 = ssub.s32 %s22, 2
      %s29 = sadd.s32 %s22, 1
      %s30 = ssub.s32 %s22, %s29
      %p31 = scmp.eq.s32.totalorder %s30, 0
      %s33 = sadd.s32 %s32, 1
      %s34 = scalar_select %p31, %s32, %s33
      %p37 = pneg %p31
      %p38 = scmp.eq.s32.totalorder %s22, 1
      %p39 = por %p37, %p38
      %p40 = scmp.ne.s32.totalorder %s32, %s35
      %p41 = scmp.eq.s32.totalorder %s22, 0
      %p42 = por %p40, %p41
      %p43 = scmp.ne.s32.totalorder %s32, %s35
      %p44 = scmp.eq.s32.totalorder %s27, 1
      %p45 = por %p43, %p44
      %p46 = scmp.ne.s32.totalorder %s35, %s36
      %p47 = scmp.eq.s32.totalorder %s27, 0
      %p48 = por %p46, %p47
      %p49 = scmp.ne.s32.totalorder %s35, %s36
      %p50 = scmp.eq.s32.totalorder %s28, 1
      %p51 = por %p49, %p50
      %p53 = scmp.ne.s32.totalorder %s36, %s52
      %p54 = scmp.eq.s32.totalorder %s28, 0
      %p55 = por %p53, %p54
      %s56 = ssub.s32 %s22, %s29
      %p57 = scmp.eq.s32.totalorder %s56, 0
      %s59 = sadd.s32 %s58, 1
      %s60 = scalar_select %p57, %s58, %s59
      %p63 = pneg %p57
      %p64 = scmp.eq.s32.totalorder %s22, 1
      %p65 = por %p63, %p64
      %p66 = scmp.ne.s32.totalorder %s58, %s61
      %p67 = scmp.eq.s32.totalorder %s22, 0
      %p68 = por %p66, %p67
      %p69 = scmp.ne.s32.totalorder %s58, %s61
      %p70 = scmp.eq.s32.totalorder %s27, 1
      %p71 = por %p69, %p70
      %p72 = scmp.ne.s32.totalorder %s61, %s62
      %p73 = scmp.eq.s32.totalorder %s27, 0
      %p74 = por %p72, %p73
      %p75 = scmp.ne.s32.totalorder %s61, %s62
      %p76 = scmp.eq.s32.totalorder %s28, 1
      %p77 = por %p75, %p76
      %p79 = scmp.ne.s32.totalorder %s62, %s78
      %p80 = scmp.eq.s32.totalorder %s28, 0
      %p81 = por %p79, %p80
      %s83 = sadd.s32 %s82, 1
      %p86 = scmp.eq.s32.totalorder %s22, 1
      %p87 = scmp.ne.s32.totalorder %s82, %s84
      %p88 = scmp.eq.s32.totalorder %s22, 0
      %p89 = por %p87, %p88
      %p90 = scmp.ne.s32.totalorder %s82, %s84
      %p91 = scmp.eq.s32.totalorder %s27, 1
      %p92 = por %p90, %p91
      %p93 = scmp.ne.s32.totalorder %s84, %s85
      %p94 = scmp.eq.s32.totalorder %s27, 0
      %p95 = por %p93, %p94
      %p96 = scmp.ne.s32.totalorder %s84, %s85
      %p97 = scmp.eq.s32.totalorder %s28, 1
      %p98 = por %p96, %p97
      %p100 = scmp.ne.s32.totalorder %s85, %s99
      %p101 = scmp.eq.s32.totalorder %s28, 0
      %p102 = por %p100, %p101
      %s104 = sadd.s32 %s103, 1
      %p107 = scmp.eq.s32.totalorder %s22, 1
      %p108 = scmp.ne.s32.totalorder %s103, %s105
      %p109 = scmp.eq.s32.totalorder %s22, 0
      %p110 = por %p108, %p109
      %p111 = scmp.ne.s32.totalorder %s103, %s105
      %p112 = scmp.eq.s32.totalorder %s27, 1
      %p113 = por %p111, %p112
      %p114 = scmp.ne.s32.totalorder %s105, %s106
      %p115 = scmp.eq.s32.totalorder %s27, 0
      %p116 = por %p114, %p115
      %p117 = scmp.ne.s32.totalorder %s105, %s106
      %p118 = scmp.eq.s32.totalorder %s28, 1
      %p119 = por %p117, %p118
      %p121 = scmp.ne.s32.totalorder %s106, %s120
      %p122 = scmp.eq.s32.totalorder %s28, 0
      %p123 = por %p121, %p122
      %s125 = sadd.s32 %s124, 1
      %p128 = scmp.eq.s32.totalorder %s22, 1
      %p129 = scmp.ne.s32.totalorder %s124, %s126
      %p130 = scmp.eq.s32.totalorder %s22, 0
      %p131 = por %p129, %p130
      %p132 = scmp.ne.s32.totalorder %s124, %s126
      %p133 = scmp.eq.s32.totalorder %s27, 1
      %p134 = por %p132, %p133
      %p135 = scmp.ne.s32.totalorder %s126, %s127
      %p136 = scmp.eq.s32.totalorder %s27, 0
      %p137 = por %p135, %p136
      %p138 = scmp.ne.s32.totalorder %s126, %s127
      %p139 = scmp.eq.s32.totalorder %s28, 1
      %p140 = por %p138, %p139
      %p142 = scmp.ne.s32.totalorder %s127, %s141
      %p143 = scmp.eq.s32.totalorder %s28, 0
      %p144 = por %p142, %p143
      %s146 = sadd.s32 %s145, 1
      %p149 = scmp.eq.s32.totalorder %s22, 1
      %p150 = scmp.ne.s32.totalorder %s145, %s147
      %p151 = scmp.eq.s32.totalorder %s22, 0
      %p152 = por %p150, %p151
      %p153 = scmp.ne.s32.totalorder %s145, %s147
      %p154 = scmp.eq.s32.totalorder %s27, 1
      %p155 = por %p153, %p154
      %p156 = scmp.ne.s32.totalorder %s147, %s148
      %p157 = scmp.eq.s32.totalorder %s27, 0
      %p158 = por %p156, %p157
      %p159 = scmp.ne.s32.totalorder %s147, %s148
      %p160 = scmp.eq.s32.totalorder %s28, 1
      %p161 = por %p159, %p160
      %p163 = scmp.ne.s32.totalorder %s148, %s162
      %p164 = scmp.eq.s32.totalorder %s28, 0
      %p165 = por %p163, %p164
      %s167 = sadd.s32 %s166, 1
      %p170 = scmp.eq.s32.totalorder %s22, 1
      %p171 = scmp.ne.s32.totalorder %s166, %s168
      %p172 = scmp.eq.s32.totalorder %s22, 0
      %p173 = por %p171, %p172
      %p174 = scmp.ne.s32.totalorder %s166, %s168
      %p175 = scmp.eq.s32.totalorder %s27, 1
      %p176 = por %p174, %p175
      %p177 = scmp.ne.s32.totalorder %s168, %s169
      %p178 = scmp.eq.s32.totalorder %s27, 0
      %p179 = por %p177, %p178
      %p180 = scmp.ne.s32.totalorder %s168, %s169
      %p181 = scmp.eq.s32.totalorder %s28, 1
      %p182 = por %p180, %p181
      %p184 = scmp.ne.s32.totalorder %s169, %s183
      %p185 = scmp.eq.s32.totalorder %s28, 0
      %p186 = por %p184, %p185
      %s188 = sadd.s32 %s187, 1
      %p191 = scmp.eq.s32.totalorder %s22, 1
      %p192 = scmp.ne.s32.totalorder %s187, %s189
      %p193 = scmp.eq.s32.totalorder %s22, 0
      %p194 = por %p192, %p193
      %p195 = scmp.ne.s32.totalorder %s187, %s189
      %p196 = scmp.eq.s32.totalorder %s27, 1
      %p197 = por %p195, %p196
      %p198 = scmp.ne.s32.totalorder %s189, %s190
      %p199 = scmp.eq.s32.totalorder %s27, 0
      %p200 = por %p198, %p199
      %p201 = scmp.ne.s32.totalorder %s189, %s190
      %p202 = scmp.eq.s32.totalorder %s28, 1
      %p203 = por %p201, %p202
      %p205 = scmp.ne.s32.totalorder %s190, %s204
      %p206 = scmp.eq.s32.totalorder %s28, 0
      %p207 = por %p205, %p206
      %s209 = sadd.s32 %s208, 1
      %p212 = scmp.eq.s32.totalorder %s22, 1
      %p213 = scmp.ne.s32.totalorder %s208, %s210
      %p214 = scmp.eq.s32.totalorder %s22, 0
      %p215 = por %p213, %p214
      %p216 = scmp.ne.s32.totalorder %s208, %s210
      %p217 = scmp.eq.s32.totalorder %s27, 1
      %p218 = por %p216, %p217
      %p219 = scmp.ne.s32.totalorder %s210, %s211
      %p220 = scmp.eq.s32.totalorder %s27, 0
      %p221 = por %p219, %p220
      %p222 = scmp.ne.s32.totalorder %s210, %s211
      %p223 = scmp.eq.s32.totalorder %s28, 1
      %p224 = por %p222, %p223
      %p226 = scmp.ne.s32.totalorder %s211, %s225
      %p227 = scmp.eq.s32.totalorder %s28, 0
      %p228 = por %p226, %p227
      %s230 = sadd.s32 %s229, 1
      %p233 = scmp.eq.s32.totalorder %s22, 1
      %p234 = scmp.ne.s32.totalorder %s229, %s231
      %p235 = scmp.eq.s32.totalorder %s22, 0
      %p236 = por %p234, %p235
      %p237 = scmp.ne.s32.totalorder %s229, %s231
      %p238 = scmp.eq.s32.totalorder %s27, 1
      %p239 = por %p237, %p238
      %p240 = scmp.ne.s32.totalorder %s231, %s232
      %p241 = scmp.eq.s32.totalorder %s27, 0
      %p242 = por %p240, %p241
      %p243 = scmp.ne.s32.totalorder %s231, %s232
      %p244 = scmp.eq.s32.totalorder %s28, 1
      %p245 = por %p243, %p244
      %p247 = scmp.ne.s32.totalorder %s232, %s246
      %p248 = scmp.eq.s32.totalorder %s28, 0
      %p249 = por %p247, %p248
      %s250 = ssub.s32 %s22, %s29
      %p251 = scmp.eq.s32.totalorder %s250, 0
      %s253 = sadd.s32 %s252, 1
      %s254 = scalar_select %p251, %s252, %s253
      %p257 = pneg %p251
      %p258 = scmp.eq.s32.totalorder %s22, 1
      %p259 = por %p257, %p258
      %p260 = scmp.ne.s32.totalorder %s252, %s255
      %p261 = scmp.eq.s32.totalorder %s22, 0
      %p262 = por %p260, %p261
      %p263 = scmp.ne.s32.totalorder %s252, %s255
      %p264 = scmp.eq.s32.totalorder %s27, 1
      %p265 = por %p263, %p264
      %p266 = scmp.ne.s32.totalorder %s255, %s256
      %p267 = scmp.eq.s32.totalorder %s27, 0
      %p268 = por %p266, %p267
      %p269 = scmp.ne.s32.totalorder %s255, %s256
      %p270 = scmp.eq.s32.totalorder %s28, 1
      %p271 = por %p269, %p270
      %p273 = scmp.ne.s32.totalorder %s256, %s272
      %p274 = scmp.eq.s32.totalorder %s28, 0
      %p275 = por %p273, %p274
      %p276 = scmp.le.s32.totalorder 1, %s22
      %p277 = scmp.lt.s32.totalorder %s22, 3
      %p278 = pnand %p276, %p277
      %p279 = pneg %p278
      // Predicated region
      $region9: #{tpu_custom_call.1} parent=5 // pred_check
        _
      $region10: #{tpu_custom_call.1} parent=5 // pred_check_branch
        %281 = sbr.rel (%p278) target = $region12
      $region11: #{tpu_custom_call.1} parent=5 // pred_region
        %s282 = ssub.s32 %s22, 1
        // Predicated region
        $region13: #{tpu_custom_call.1} parent=11 // pred_check
          %p283 = pneg %p95
        $region14: #{tpu_custom_call.1} parent=11 // pred_check_branch
          %285 = sbr.rel (%p283) target = $region16
        $region15: #{tpu_custom_call.1} parent=11 // pred_region
          _
        $region16: #{tpu_custom_call.1} parent=11 // pred_fallthru
          _
        // Predicated region
        $region17: #{tpu_custom_call.1} parent=11 // pred_check
          %p286 = pneg %p116
        $region18: #{tpu_custom_call.1} parent=11 // pred_check_branch
          %288 = sbr.rel (%p286) target = $region20
        $region19: #{tpu_custom_call.1} parent=11 // pred_region
          _
        $region20: #{tpu_custom_call.1} parent=11 // pred_fallthru
          _
        // Predicated region
        $region21: #{tpu_custom_call.1} parent=11 // pred_check
          %p289 = pneg %p137
        $region22: #{tpu_custom_call.1} parent=11 // pred_check_branch
          %291 = sbr.rel (%p289) target = $region24
        $region23: #{tpu_custom_call.1} parent=11 // pred_region
          _
        $region24: #{tpu_custom_call.1} parent=11 // pred_fallthru
          _
        // Predicated region
        $region25: #{tpu_custom_call.1} parent=11 // pred_check
          %p292 = pneg %p158
        $region26: #{tpu_custom_call.1} parent=11 // pred_check_branch
          %294 = sbr.rel (%p292) target = $region28
        $region27: #{tpu_custom_call.1} parent=11 // pred_region
          _
        $region28: #{tpu_custom_call.1} parent=11 // pred_fallthru
          _
        // Predicated region
        $region29: #{tpu_custom_call.1} parent=11 // pred_check
          %p295 = pneg %p179
        $region30: #{tpu_custom_call.1} parent=11 // pred_check_branch
          %297 = sbr.rel (%p295) target = $region32
        $region31: #{tpu_custom_call.1} parent=11 // pred_region
          _
        $region32: #{tpu_custom_call.1} parent=11 // pred_fallthru
          _
        // Predicated region
        $region33: #{tpu_custom_call.1} parent=11 // pred_check
          %p298 = pneg %p200
        $region34: #{tpu_custom_call.1} parent=11 // pred_check_branch
          %300 = sbr.rel (%p298) target = $region36
        $region35: #{tpu_custom_call.1} parent=11 // pred_region
          _
        $region36: #{tpu_custom_call.1} parent=11 // pred_fallthru
          _
        // Predicated region
        $region37: #{tpu_custom_call.1} parent=11 // pred_check
          %p301 = pneg %p221
        $region38: #{tpu_custom_call.1} parent=11 // pred_check_branch
          %303 = sbr.rel (%p301) target = $region40
        $region39: #{tpu_custom_call.1} parent=11 // pred_region
          _
        $region40: #{tpu_custom_call.1} parent=11 // pred_fallthru
          _
        // Predicated region
        $region41: #{tpu_custom_call.1} parent=11 // pred_check
          %p304 = pneg %p242
        $region42: #{tpu_custom_call.1} parent=11 // pred_check_branch
          %306 = sbr.rel (%p304) target = $region44
        $region43: #{tpu_custom_call.1} parent=11 // pred_region
          _
        $region44: #{tpu_custom_call.1} parent=11 // pred_fallthru
          _
      $region12: #{tpu_custom_call.1} parent=5 // pred_fallthru
        _
      %p307 = scmp.lt.s32.totalorder %s22, 2
      // Predicated region
      $region45: #{tpu_custom_call.1} parent=5 // pred_check
        %p308 = pneg %p307
      $region46: #{tpu_custom_call.1} parent=5 // pred_check_branch
        %310 = sbr.rel (%p308) target = $region48
      $region47: #{tpu_custom_call.1} parent=5 // pred_region
        // Predicated region
        $region49: #{tpu_custom_call.1} parent=47 // pred_check
          %p311 = pneg %p42
        $region50: #{tpu_custom_call.1} parent=47 // pred_check_branch
          %313 = sbr.rel (%p311) target = $region52
        $region51: #{tpu_custom_call.1} parent=47 // pred_region
          %p314 = scmp.lt.s32.totalorder %s22, 1
          %s315 = scalar_select %p314, %s22, 1
          %s316 = smul.addr %s315, 2
          %s317 = smul.addr %s316, 8
          %s318 = scalar_lea.vmem %s0, %s317
        $region52: #{tpu_custom_call.1} parent=47 // pred_fallthru
          _
        // Predicated region
        $region53: #{tpu_custom_call.1} parent=47 // pred_check
          %p319 = pneg %p68
        $region54: #{tpu_custom_call.1} parent=47 // pred_check_branch
          %321 = sbr.rel (%p319) target = $region56
        $region55: #{tpu_custom_call.1} parent=47 // pred_region
          %s322 = sand.u32 %s58, 1
          %s323 = scalar_lea.sflag [#allocation3], %s322
          %s324 = sand.u32 %s58, 1
          %s325 = smul.addr %s324, 16
          %s326 = scalar_lea.vmem [#allocation2], %s325
          %s328 = ssub.s32 256, 256
          %329 = vsyncadd %s323, %s328
          %s330 = smul.addr %s22, 2
          %s331 = smul.addr %s330, 128
          %s332 = scalar_lea.hbm %s1, %s331
          %s334 = sshll.u32 %s326, 4
          %s335 = int_to_ptr.vmem [resolvable:$true] %s334
          %337 = dma.hbm_to_vmem [thread:$0]  %s332, 256, %s335, %s323
        $region56: #{tpu_custom_call.1} parent=47 // pred_fallthru
          _
      $region48: #{tpu_custom_call.1} parent=5 // pred_fallthru
        _
      %p338 = scmp.le.s32.totalorder 1, %s22
      %p339 = scmp.lt.s32.totalorder %s22, 3
      %p340 = pnand %p338, %p339
      %p341 = pneg %p340
      // Predicated region
      $region57: #{tpu_custom_call.1} parent=5 // pred_check
        _
      $region58: #{tpu_custom_call.1} parent=5 // pred_check_branch
        %343 = sbr.rel (%p340) target = $region60
      $region59: #{tpu_custom_call.1} parent=5 // pred_region
        %s344 = ssub.s32 %s22, 1
        %s345 = sand.u32 %s61, 1
        %s346 = scalar_lea.sflag [#allocation3], %s345
        %s347 = sand.u32 %s61, 1
        %s348 = smul.addr %s347, 16
        %s349 = scalar_lea.vmem [#allocation2], %s348
        // Predicated region
        $region61: #{tpu_custom_call.1} parent=59 // pred_check
          %p350 = pneg %p74
        $region62: #{tpu_custom_call.1} parent=59 // pred_check_branch
          %352 = sbr.rel (%p350) target = $region64
        $region63: #{tpu_custom_call.1} parent=59 // pred_region
          %353 = dma.done %s346, 256
        $region64: #{tpu_custom_call.1} parent=59 // pred_fallthru
          _
        %p354 = scmp.lt.s32.totalorder %s27, 1
        %s355 = scalar_select %p354, %s27, 1
        %s356 = smul.addr %s355, 2
        %s357 = smul.addr %s356, 8
        %s358 = scalar_lea.vmem %s0, %s357
        %p359 = pneg %p48
        %p360 = pneg %p45
        %s361 = sand.u32 %s61, 1
        %s362 = scalar_lea.sflag [#allocation3], %s361
        %s363 = sand.u32 %s61, 1
        %s364 = smul.addr %s363, 16
        %s365 = scalar_lea.vmem [#allocation2], %s364
        %p366 = pneg %p74
        %p367 = pneg %p71
        %p368 = pneg %p95
        %p369 = pneg %p92
        %p370 = pneg %p116
        %p371 = pneg %p113
        %p372 = pneg %p137
        %p373 = pneg %p134
        %p374 = pneg %p158
        %p375 = pneg %p155
        %p376 = pneg %p179
        %p377 = pneg %p176
        %p378 = pneg %p200
        %p379 = pneg %p197
        %p380 = pneg %p221
        %p381 = pneg %p218
        %p382 = pneg %p242
        %p383 = pneg %p239
        %p384 = pneg %p268
        %p385 = pneg %p265
        %s386 = sand.u32 %s255, 1
        %s387 = scalar_lea.sflag [#allocation4], %s386
        %s388 = sand.u32 %s255, 1
        %s389 = smul.addr %s388, 16
        %s390 = scalar_lea.vmem [#allocation5], %s389
        %p391 = scmp.lt.s32.totalorder %s27, 1
        %s392 = scalar_select %p391, %s27, 1
        %s393 = smul.addr %s392, 2
        %s394 = smul.addr %s393, 8
        %s395 = scalar_lea.vmem %s0, %s394
        %v396 = vld [vmem:[%s395] sm:$0xff]
        %v397 = vld [vmem:[%s395 + $0x8] sm:$0xff]
        %v398 = vld [vmem:[%s349] sm:$0xff]
        %v399 = vld [vmem:[%s349 + $0x8] sm:$0xff]
        %v400 = vadd.f32 %v396, %v397
        %401 = vadd.xlane.f32.xlu0 %v400
        %v402 = vpop.xlane.xlu0 %401
        %v403 = vmul.f32 %v402, 0.00390625
        %v404 = vld [vmem:[%s6] sm:$0xf]
        %v405 = vld [vmem:[%s7] sm:$0xf]
        %vm406 = vcmask 64512
        %v408 = vsel %vm406, %v404, 0
        %410 = vmatprep.subr.mxu0 0.0
        %411 = vmatpush1.msra.mxu0 %v403
        %412 = vmatprep.subr.mxu0 0.0
        %413 = vmatpush1.msra.mxu0 0.0
        %414 = vmatprep.subr.mxu0 0.0
        %415 = vmatpush1.msra.mxu0 0.0
        %416 = vmatprep.subr.mxu0 0.0
        %417 = vmatpush1.msra.mxu0 0.0
        %418 = vmatprep.subr.mxu0 0.0
        %419 = vmatpush1.msra.mxu0 0.0
        %420 = vmatprep.subr.mxu0 0.0
        %421 = vmatpush1.msra.mxu0 0.0
        %422 = vmatprep.subr.mxu0 0.0
        %423 = vmatpush1.msra.mxu0 0.0
        %424 = vmatprep.subr.mxu0 0.0
        %425 = vmatpush1.msra.mxu0 0.0
        %426 = vmatprep.subr.mxu0 0.0
        %427 = vmatpush1.msra.mxu0 0.0
        %428 = vmatprep.subr.mxu0 0.0
        %429 = vmatpush1.msra.mxu0 0.0
        %430 = vmatprep.subr.mxu0 0.0
        %431 = vmatpush1.msra.mxu0 0.0
        %432 = vmatprep.subr.mxu0 0.0
        %433 = vmatpush1.msra.mxu0 0.0
        %434 = vmatprep.subr.mxu0 0.0
        %435 = vmatpush1.msra.mxu0 0.0
        %436 = vmatprep.subr.mxu0 0.0
        %437 = vmatpush1.msra.mxu0 0.0
        %438 = vmatprep.subr.mxu0 0.0
        %439 = vmatpush1.msra.mxu0 0.0
        %440 = vmatprep.subr.mxu0 0.0
        %441 = vmatpush1.msra.mxu0 0.0
        %442 = vmatprep.subr.mxu0 0.0
        %443 = vmatpush1.msra.mxu0 0.0
        %444 = vmatprep.subr.mxu0 0.0
        %445 = vmatpush1.msra.mxu0 0.0
        %446 = vmatprep.subr.mxu0 0.0
        %447 = vmatpush1.msra.mxu0 0.0
        %448 = vmatprep.subr.mxu0 0.0
        %449 = vmatpush1.msra.mxu0 0.0
        %450 = vmatprep.subr.mxu0 0.0
        %451 = vmatpush1.msra.mxu0 0.0
        %452 = vmatprep.subr.mxu0 0.0
        %453 = vmatpush1.msra.mxu0 0.0
        %454 = vmatprep.subr.mxu0 0.0
        %455 = vmatpush1.msra.mxu0 0.0
        %456 = vmatprep.subr.mxu0 0.0
        %457 = vmatpush1.msra.mxu0 0.0
        %458 = vmatprep.subr.mxu0 0.0
        %459 = vmatpush1.msra.mxu0 0.0
        %460 = vmatprep.subr.mxu0 0.0
        %461 = vmatpush1.msra.mxu0 0.0
        %462 = vmatprep.subr.mxu0 0.0
        %463 = vmatpush1.msra.mxu0 0.0
        %464 = vmatprep.subr.mxu0 0.0
        %465 = vmatpush1.msra.mxu0 0.0
        %466 = vmatprep.subr.mxu0 0.0
        %467 = vmatpush1.msra.mxu0 0.0
        %468 = vmatprep.subr.mxu0 0.0
        %469 = vmatpush1.msra.mxu0 0.0
        %470 = vmatprep.subr.mxu0 0.0
        %471 = vmatpush1.msra.mxu0 0.0
        %472 = vmatprep.subr.mxu0 0.0
        %473 = vmatpush1.msra.mxu0 0.0
        %474 = vmatprep.mubr.f32.mxu0 0.0
        %475 = vmatmul.mubr.f32.gmra.mrb[0].mxu0 %v408
        %v476 = vpop.f32.mrb[0].mxu0
        %v477 = vadd.f32 %v405, %v476
        %v478 = vpop.f32.mrb[0].mxu0
        %479 = vdwg.mxu0
        %v480 = vmax.f32 %v477, 0.0
        %v481 = vld [vmem:[%s8] sm:$0xff]
        %v482 = vld [vmem:[%s9] sm:$0xff]
        %vm483 = vcmask 31744
        %v485 = vsel %vm483, %v481, 0
        %vm487 = vcmask 1043456
        %v489 = vsel %vm487, %v480, 0
        %491 = vmatprep.subr.mxu0 0.0
        %492 = vmatpush1.msra.mxu0 %v489
        %493 = vmatprep.subr.mxu0 0.0
        %494 = vmatpush1.msra.mxu0 0.0
        %495 = vmatprep.subr.mxu0 0.0
        %496 = vmatpush1.msra.mxu0 0.0
        %497 = vmatprep.subr.mxu0 0.0
        %498 = vmatpush1.msra.mxu0 0.0
        %499 = vmatprep.subr.mxu0 0.0
        %500 = vmatpush1.msra.mxu0 0.0
        %501 = vmatprep.subr.mxu0 0.0
        %502 = vmatpush1.msra.mxu0 0.0
        %503 = vmatprep.subr.mxu0 0.0
        %504 = vmatpush1.msra.mxu0 0.0
        %505 = vmatprep.subr.mxu0 0.0
        %506 = vmatpush1.msra.mxu0 0.0
        %507 = vmatprep.subr.mxu0 0.0
        %508 = vmatpush1.msra.mxu0 0.0
        %509 = vmatprep.subr.mxu0 0.0
        %510 = vmatpush1.msra.mxu0 0.0
        %511 = vmatprep.subr.mxu0 0.0
        %512 = vmatpush1.msra.mxu0 0.0
        %513 = vmatprep.subr.mxu0 0.0
        %514 = vmatpush1.msra.mxu0 0.0
        %515 = vmatprep.subr.mxu0 0.0
        %516 = vmatpush1.msra.mxu0 0.0
        %517 = vmatprep.subr.mxu0 0.0
        %518 = vmatpush1.msra.mxu0 0.0
        %519 = vmatprep.subr.mxu0 0.0
        %520 = vmatpush1.msra.mxu0 0.0
        %521 = vmatprep.subr.mxu0 0.0
        %522 = vmatpush1.msra.mxu0 0.0
        %523 = vmatprep.subr.mxu0 0.0
        %524 = vmatpush1.msra.mxu0 0.0
        %525 = vmatprep.subr.mxu0 0.0
        %526 = vmatpush1.msra.mxu0 0.0
        %527 = vmatprep.subr.mxu0 0.0
        %528 = vmatpush1.msra.mxu0 0.0
        %529 = vmatprep.subr.mxu0 0.0
        %530 = vmatpush1.msra.mxu0 0.0
        %531 = vmatprep.subr.mxu0 0.0
        %532 = vmatpush1.msra.mxu0 0.0
        %533 = vmatprep.subr.mxu0 0.0
        %534 = vmatpush1.msra.mxu0 0.0
        %535 = vmatprep.subr.mxu0 0.0
        %536 = vmatpush1.msra.mxu0 0.0
        %537 = vmatprep.subr.mxu0 0.0
        %538 = vmatpush1.msra.mxu0 0.0
        %539 = vmatprep.subr.mxu0 0.0
        %540 = vmatpush1.msra.mxu0 0.0
        %541 = vmatprep.subr.mxu0 0.0
        %542 = vmatpush1.msra.mxu0 0.0
        %543 = vmatprep.subr.mxu0 0.0
        %544 = vmatpush1.msra.mxu0 0.0
        %545 = vmatprep.subr.mxu0 0.0
        %546 = vmatpush1.msra.mxu0 0.0
        %547 = vmatprep.subr.mxu0 0.0
        %548 = vmatpush1.msra.mxu0 0.0
        %549 = vmatprep.subr.mxu0 0.0
        %550 = vmatpush1.msra.mxu0 0.0
        %551 = vmatprep.subr.mxu0 0.0
        %552 = vmatpush1.msra.mxu0 0.0
        %553 = vmatprep.subr.mxu0 0.0
        %554 = vmatpush1.msra.mxu0 0.0
        %555 = vmatprep.mubr.f32.mxu0 0.0
        %556 = vmatmul.mubr.f32.gmra.mrb[0].mxu0 %v485
        %v557 = vpop.f32.mrb[0].mxu0
        %v558 = vadd.f32 %v482, %v557
        %v559 = vpop.f32.mrb[0].mxu0
        %560 = vdwg.mxu0
        %v561 = vld [vmem:[%s2] sm:$0xf]
        %v562 = vld [vmem:[%s3] sm:$0xf]
        %564 = vset.pattern.permute.xlu0 0
        %565 = vperm.xlu0 %564, %v562
        %v566 = vpop.permute.xlu0 %565
        %v569 = vsel %vm406, %v561, 0
        %571 = vmatprep.subr.mxu0 %v397
        %572 = vmatpush1.msra.mxu0 %v396
        %573 = vmatprep.subr.mxu0 0.0
        %574 = vmatpush1.msra.mxu0 0.0
        %575 = vmatprep.subr.mxu0 0.0
        %576 = vmatpush1.msra.mxu0 0.0
        %577 = vmatprep.subr.mxu0 0.0
        %578 = vmatpush1.msra.mxu0 0.0
        %579 = vmatprep.subr.mxu0 0.0
        %580 = vmatpush1.msra.mxu0 0.0
        %581 = vmatprep.subr.mxu0 0.0
        %582 = vmatpush1.msra.mxu0 0.0
        %583 = vmatprep.subr.mxu0 0.0
        %584 = vmatpush1.msra.mxu0 0.0
        %585 = vmatprep.subr.mxu0 0.0
        %586 = vmatpush1.msra.mxu0 0.0
        %587 = vmatprep.subr.mxu0 0.0
        %588 = vmatpush1.msra.mxu0 0.0
        %589 = vmatprep.subr.mxu0 0.0
        %590 = vmatpush1.msra.mxu0 0.0
        %591 = vmatprep.subr.mxu0 0.0
        %592 = vmatpush1.msra.mxu0 0.0
        %593 = vmatprep.subr.mxu0 0.0
        %594 = vmatpush1.msra.mxu0 0.0
        %595 = vmatprep.subr.mxu0 0.0
        %596 = vmatpush1.msra.mxu0 0.0
        %597 = vmatprep.subr.mxu0 0.0
        %598 = vmatpush1.msra.mxu0 0.0
        %599 = vmatprep.subr.mxu0 0.0
        %600 = vmatpush1.msra.mxu0 0.0
        %601 = vmatprep.subr.mxu0 0.0
        %602 = vmatpush1.msra.mxu0 0.0
        %603 = vmatprep.subr.mxu0 0.0
        %604 = vmatpush1.msra.mxu0 0.0
        %605 = vmatprep.subr.mxu0 0.0
        %606 = vmatpush1.msra.mxu0 0.0
        %607 = vmatprep.subr.mxu0 0.0
        %608 = vmatpush1.msra.mxu0 0.0
        %609 = vmatprep.subr.mxu0 0.0
        %610 = vmatpush1.msra.mxu0 0.0
        %611 = vmatprep.subr.mxu0 0.0
        %612 = vmatpush1.msra.mxu0 0.0
        %613 = vmatprep.subr.mxu0 0.0
        %614 = vmatpush1.msra.mxu0 0.0
        %615 = vmatprep.subr.mxu0 0.0
        %616 = vmatpush1.msra.mxu0 0.0
        %617 = vmatprep.subr.mxu0 0.0
        %618 = vmatpush1.msra.mxu0 0.0
        %619 = vmatprep.subr.mxu0 0.0
        %620 = vmatpush1.msra.mxu0 0.0
        %621 = vmatprep.subr.mxu0 0.0
        %622 = vmatpush1.msra.mxu0 0.0
        %623 = vmatprep.subr.mxu0 0.0
        %624 = vmatpush1.msra.mxu0 0.0
        %625 = vmatprep.subr.mxu0 0.0
        %626 = vmatpush1.msra.mxu0 0.0
        %627 = vmatprep.subr.mxu0 0.0
        %628 = vmatpush1.msra.mxu0 0.0
        %629 = vmatprep.subr.mxu0 0.0
        %630 = vmatpush1.msra.mxu0 0.0
        %631 = vmatprep.subr.mxu0 0.0
        %632 = vmatpush1.msra.mxu0 0.0
        %633 = vmatprep.subr.mxu0 0.0
        %634 = vmatpush1.msra.mxu0 0.0
        %635 = vmatprep.mubr.f32.mxu0 0.0
        %636 = vmatmul.mubr.f32.gmra.mrb[0].mxu0 %v569
        %v637 = vpop.f32.mrb[0].mxu0
        %v638 = vadd.f32 %v566, %v637
        %v639 = vpop.f32.mrb[0].mxu0
        %v640 = vadd.f32 %v566, %v639
        %641 = vdwg.mxu0
        %v642 = vmax.f32 %v638, 0.0
        %v643 = vmax.f32 %v640, 0.0
        %v644 = vld [vmem:[%s4] sm:$0xff]
        %v645 = vld [vmem:[%s5] sm:$0xff]
        %v646 = vadd.f32 %v645, %v558
        %648 = vset.pattern.permute.xlu0 0
        %649 = vperm.xlu0 %648, %v646
        %v650 = vpop.permute.xlu0 %649
        %v653 = vsel %vm483, %v644, 0
        %v656 = vsel %vm487, %v642, 0
        %v659 = vsel %vm487, %v643, 0
        %661 = vmatprep.subr.mxu0 %v659
        %662 = vmatpush1.msra.mxu0 %v656
        %663 = vmatprep.subr.mxu0 0.0
        %664 = vmatpush1.msra.mxu0 0.0
        %665 = vmatprep.subr.mxu0 0.0
        %666 = vmatpush1.msra.mxu0 0.0
        %667 = vmatprep.subr.mxu0 0.0
        %668 = vmatpush1.msra.mxu0 0.0
        %669 = vmatprep.subr.mxu0 0.0
        %670 = vmatpush1.msra.mxu0 0.0
        %671 = vmatprep.subr.mxu0 0.0
        %672 = vmatpush1.msra.mxu0 0.0
        %673 = vmatprep.subr.mxu0 0.0
        %674 = vmatpush1.msra.mxu0 0.0
        %675 = vmatprep.subr.mxu0 0.0
        %676 = vmatpush1.msra.mxu0 0.0
        %677 = vmatprep.subr.mxu0 0.0
        %678 = vmatpush1.msra.mxu0 0.0
        %679 = vmatprep.subr.mxu0 0.0
        %680 = vmatpush1.msra.mxu0 0.0
        %681 = vmatprep.subr.mxu0 0.0
        %682 = vmatpush1.msra.mxu0 0.0
        %683 = vmatprep.subr.mxu0 0.0
        %684 = vmatpush1.msra.mxu0 0.0
        %685 = vmatprep.subr.mxu0 0.0
        %686 = vmatpush1.msra.mxu0 0.0
        %687 = vmatprep.subr.mxu0 0.0
        %688 = vmatpush1.msra.mxu0 0.0
        %689 = vmatprep.subr.mxu0 0.0
        %690 = vmatpush1.msra.mxu0 0.0
        %691 = vmatprep.subr.mxu0 0.0
        %692 = vmatpush1.msra.mxu0 0.0
        %693 = vmatprep.subr.mxu0 0.0
        %694 = vmatpush1.msra.mxu0 0.0
        %695 = vmatprep.subr.mxu0 0.0
        %696 = vmatpush1.msra.mxu0 0.0
        %697 = vmatprep.subr.mxu0 0.0
        %698 = vmatpush1.msra.mxu0 0.0
        %699 = vmatprep.subr.mxu0 0.0
        %700 = vmatpush1.msra.mxu0 0.0
        %701 = vmatprep.subr.mxu0 0.0
        %702 = vmatpush1.msra.mxu0 0.0
        %703 = vmatprep.subr.mxu0 0.0
        %704 = vmatpush1.msra.mxu0 0.0
        %705 = vmatprep.subr.mxu0 0.0
        %706 = vmatpush1.msra.mxu0 0.0
        %707 = vmatprep.subr.mxu0 0.0
        %708 = vmatpush1.msra.mxu0 0.0
        %709 = vmatprep.subr.mxu0 0.0
        %710 = vmatpush1.msra.mxu0 0.0
        %711 = vmatprep.subr.mxu0 0.0
        %712 = vmatpush1.msra.mxu0 0.0
        %713 = vmatprep.subr.mxu0 0.0
        %714 = vmatpush1.msra.mxu0 0.0
        %715 = vmatprep.subr.mxu0 0.0
        %716 = vmatpush1.msra.mxu0 0.0
        %717 = vmatprep.subr.mxu0 0.0
        %718 = vmatpush1.msra.mxu0 0.0
        %719 = vmatprep.subr.mxu0 0.0
        %720 = vmatpush1.msra.mxu0 0.0
        %721 = vmatprep.subr.mxu0 0.0
        %722 = vmatpush1.msra.mxu0 0.0
        %723 = vmatprep.subr.mxu0 0.0
        %724 = vmatpush1.msra.mxu0 0.0
        %725 = vmatprep.mubr.f32.mxu0 0.0
        %726 = vmatmul.mubr.f32.gmra.mrb[0].mxu0 %v653
        %v727 = vpop.f32.mrb[0].mxu0
        %v728 = vadd.f32 %v650, %v727
        %v729 = vpop.f32.mrb[0].mxu0
        %v730 = vadd.f32 %v650, %v729
        %731 = vdwg.mxu0
        %v732 = vsub.f32 0.0, %v728
        %v733 = vsub.f32 0.0, %v730
        %v734 = vmul.f32 %v732, 1.442695
        %v735 = vpow.pop %v734
        %v736 = vmul.f32 %v733, 1.442695
        %v737 = vpow.pop %v736
        %v738 = vadd.f32 %v735, 1.0
        %v739 = vadd.f32 %v737, 1.0
        %v740 = vrcp.pop %v738
        %v741 = vrcp.pop %v739
        %v742 = vsub.f32 %v396, %v398
        %v743 = vsub.f32 %v397, %v399
        %v744 = vmul.f32 %v740, %v742
        %v745 = vmul.f32 %v741, %v743
        %v746 = vadd.f32 %v398, %v744
        %v747 = vadd.f32 %v399, %v745
        %748 = vst [vmem:[%s390] sm:$0xff] %v746
        %749 = vst [vmem:[%s390 + $0x8] sm:$0xff] %v747
        %s750 = sand.u32 %s255, 1
        %s751 = scalar_lea.sflag [#allocation4], %s750
        %s752 = sand.u32 %s255, 1
        %s753 = smul.addr %s752, 16
        %s754 = scalar_lea.vmem [#allocation5], %s753
        // Predicated region
        $region65: #{tpu_custom_call.1} parent=59 // pred_check
          %p755 = pneg %p265
        $region66: #{tpu_custom_call.1} parent=59 // pred_check_branch
          %757 = sbr.rel (%p755) target = $region68
        $region67: #{tpu_custom_call.1} parent=59 // pred_region
          %s759 = ssub.s32 256, 256
          %760 = vsyncadd %s751, %s759
          %s761 = smul.addr %s27, 2
          %s762 = smul.addr %s761, 128
          %s763 = scalar_lea.hbm %s10, %s762
          %s765 = sshll.u32 %s754, 4
          %s766 = int_to_ptr.vmem [resolvable:$true] %s765
          %768 = dma.vmem_to_hbm [thread:$0]  %s766, 256, %s763, %s751
        $region68: #{tpu_custom_call.1} parent=59 // pred_fallthru
          _
      $region60: #{tpu_custom_call.1} parent=5 // pred_fallthru
        _
      %p769 = scmp.le.s32.totalorder 2, %s22
      // Predicated region
      $region69: #{tpu_custom_call.1} parent=5 // pred_check
        %p770 = pneg %p769
      $region70: #{tpu_custom_call.1} parent=5 // pred_check_branch
        %772 = sbr.rel (%p770) target = $region72
      $region71: #{tpu_custom_call.1} parent=5 // pred_region
        %s773 = ssub.s32 %s22, 2
        // Predicated region
        $region73: #{tpu_custom_call.1} parent=71 // pred_check
          %p774 = pneg %p271
        $region74: #{tpu_custom_call.1} parent=71 // pred_check_branch
          %776 = sbr.rel (%p774) target = $region76
        $region75: #{tpu_custom_call.1} parent=71 // pred_region
          %s777 = sand.u32 %s256, 1
          %s778 = scalar_lea.sflag [#allocation4], %s777
          %s779 = sand.u32 %s256, 1
          %s780 = smul.addr %s779, 16
          %s781 = scalar_lea.vmem [#allocation5], %s780
          %782 = dma.done %s778, 256
        $region76: #{tpu_custom_call.1} parent=71 // pred_fallthru
          _
      $region72: #{tpu_custom_call.1} parent=5 // pred_fallthru
        _
    $region6: #{tpu_custom_call.1} parent=1 // loop_footer
      %s26 = sadd.s32 1, %s22
    $region7: #{tpu_custom_call.1} parent=1 // loop_footer_branch
      %21 = sbr.rel target = $region3
    $region8: #{tpu_custom_call.1} parent=1 // loop_exit
      _
    %783 = vsyncpa [#allocation3], 1
    %s784 = scalar_lea.sflag [#allocation3], 1
    %785 = vsyncpa %s784, 1
    %786 = vsyncpa [#allocation4], 1
    %s787 = scalar_lea.sflag [#allocation4], 1
    %788 = vsyncpa %s787, 1

</llo_original>
